<compile_context>
chip_gen: v6e
topology: v6e:2x2x1
jax: 0.10.0
libtpu: 0.0.40
codegen_flags: <defaults>
</compile_context>

<pallas_src>
import functools
import math

import jax
import jax.numpy as jnp
from jax.experimental import pallas as pl
from jax.experimental.pallas import tpu as pltpu


_MAX_CONCURRENT_DMAS = 8          # enough to spread across DMA engines
_MIN_BYTES_PER_DMA = 1 << 20      # don't shard tiny copies into tiny DMAs


def _chunk_rows(n_rows, row_bytes):
    """Split the leading dim into static, near-equal contiguous (start, size) chunks."""
    total_bytes = n_rows * row_bytes
    n_chunks = min(
        _MAX_CONCURRENT_DMAS,
        n_rows,
        max(1, total_bytes // _MIN_BYTES_PER_DMA),
    )
    base, rem = divmod(n_rows, n_chunks)
    chunks = []
    start = 0
    for i in range(n_chunks):
        size = base + (1 if i < rem else 0)
        chunks.append((start, size))
        start += size
    return chunks


def _dma_copy_kernel(chunks, x_hbm, o_hbm, sems):
    # Direct HBM->HBM DMA copy of the whole array, split into `chunks`
    # contiguous leading-dim ranges (static, trace-time constants).
    # Start all copies first, then wait on all, so they run concurrently.
    copies = [
        pltpu.make_async_copy(
            x_hbm.at[pl.ds(start, size)],
            o_hbm.at[pl.ds(start, size)],
            sems.at[i],
        )
        for i, (start, size) in enumerate(chunks)
    ]
    for cp in copies:
        cp.start()
    for cp in copies:
        cp.wait()


def reshape_forward(x, shape):
    """Pallas implementation of `Reshape(*shape).forward(x)` == x.view(-1, *shape)."""
    total = int(x.size)
    tail = math.prod(shape) if len(shape) else 1
    assert tail > 0 and total % tail == 0, "view(-1, *shape): size not divisible"
    out_shape = (total // tail,) + tuple(int(s) for s in shape)

    if total == 0:
        return jnp.reshape(x, out_shape)

    # The semantic reshape (metadata-only whenever XLA's tiled layout allows).
    # Input and output of the kernel now share the exact same shape, so the
    # kernel produces the final shape directly -- no post-kernel reshape.
    x_r = jnp.reshape(x, out_shape)

    itemsize = jnp.dtype(x.dtype).itemsize
    chunks = _chunk_rows(out_shape[0], tail * itemsize)

    return pl.pallas_call(
        functools.partial(_dma_copy_kernel, chunks),
        out_shape=jax.ShapeDtypeStruct(out_shape, x.dtype),
        in_specs=[pl.BlockSpec(memory_space=pl.ANY)],
        out_specs=pl.BlockSpec(memory_space=pl.ANY),
        scratch_shapes=[pltpu.SemaphoreType.DMA((len(chunks),))],
    )(x_r)


if __name__ == "__main__":
    key = jax.random.PRNGKey(0)

    # Module: Reshape(64, 16)  ->  forward(x) == x.view(-1, 64, 16)
    target_shape = (64, 16)
    B, C, H, W = 2, 4, 16, 16
    x = jax.random.normal(key, (B, C, H, W), dtype=jnp.float32)

    out = reshape_forward(x, target_shape)
    out = jax.block_until_ready(out)

    ref = jnp.reshape(x, (-1,) + target_shape)
    assert out.shape == ref.shape, (out.shape, ref.shape)
    assert bool(jnp.array_equal(out, ref)), "mismatch vs reference reshape"

    print("KERNEL_OK")
</pallas_src>

<mosaic_0001>
module attributes {stable_mosaic.version = 11 : i64} {
  func.func @_dma_copy_kernel(%arg0: memref<2x64x16xf32, #tpu.memory_space<any>>, %arg1: memref<2x64x16xf32, #tpu.memory_space<any>>, %arg2: memref<1x!tpu.dma_semaphore, #tpu.memory_space<semaphore_mem>>) attributes {dimension_semantics = [], scalar_prefetch = 0 : i64, scratch_operands = 1 : i64, tpu.core_type = #tpu.core_type<tc>} {
    %c0_i32 = arith.constant 0 : i32
    %c0_i32_0 = arith.constant 0 : i32
    %c0_i32_1 = arith.constant 0 : i32
    %c0_i32_2 = arith.constant 0 : i32
    %0 = tpu.memref_slice %arg0[%c0_i32_0, %c0_i32_1, %c0_i32_2] : memref<2x64x16xf32, #tpu.memory_space<any>> -> memref<2x64x16xf32, #tpu.memory_space<any>>
    %c0_i32_3 = arith.constant 0 : i32
    %c0_i32_4 = arith.constant 0 : i32
    %c0_i32_5 = arith.constant 0 : i32
    %1 = tpu.memref_slice %arg1[%c0_i32_3, %c0_i32_4, %c0_i32_5] : memref<2x64x16xf32, #tpu.memory_space<any>> -> memref<2x64x16xf32, #tpu.memory_space<any>>
    %2 = tpu.memref_slice %arg2[%c0_i32] : memref<1x!tpu.dma_semaphore, #tpu.memory_space<semaphore_mem>> -> memref<1x!tpu.dma_semaphore, #tpu.memory_space<semaphore_mem>>
    %3 = tpu.memref_squeeze %2 : memref<1x!tpu.dma_semaphore, #tpu.memory_space<semaphore_mem>> -> memref<!tpu.dma_semaphore, #tpu.memory_space<semaphore_mem>>
    tpu.enqueue_dma source(%0 : memref<2x64x16xf32, #tpu.memory_space<any>>) target(%1 : memref<2x64x16xf32, #tpu.memory_space<any>>) target_semaphore(%3 : memref<!tpu.dma_semaphore, #tpu.memory_space<semaphore_mem>>)
    %c0_i32_6 = arith.constant 0 : i32
    %c0_i32_7 = arith.constant 0 : i32
    %c0_i32_8 = arith.constant 0 : i32
    %c0_i32_9 = arith.constant 0 : i32
    %4 = tpu.memref_slice %arg0[%c0_i32_7, %c0_i32_8, %c0_i32_9] : memref<2x64x16xf32, #tpu.memory_space<any>> -> memref<2x64x16xf32, #tpu.memory_space<any>>
    %c0_i32_10 = arith.constant 0 : i32
    %c0_i32_11 = arith.constant 0 : i32
    %c0_i32_12 = arith.constant 0 : i32
    %5 = tpu.memref_slice %arg1[%c0_i32_10, %c0_i32_11, %c0_i32_12] : memref<2x64x16xf32, #tpu.memory_space<any>> -> memref<2x64x16xf32, #tpu.memory_space<any>>
    %6 = tpu.memref_slice %arg2[%c0_i32_6] : memref<1x!tpu.dma_semaphore, #tpu.memory_space<semaphore_mem>> -> memref<1x!tpu.dma_semaphore, #tpu.memory_space<semaphore_mem>>
    %7 = tpu.memref_squeeze %6 : memref<1x!tpu.dma_semaphore, #tpu.memory_space<semaphore_mem>> -> memref<!tpu.dma_semaphore, #tpu.memory_space<semaphore_mem>>
    tpu.wait_dma2 semaphore(%7 : memref<!tpu.dma_semaphore, #tpu.memory_space<semaphore_mem>>) src(%4 : memref<2x64x16xf32, #tpu.memory_space<any>>) dst(%5 : memref<2x64x16xf32, #tpu.memory_space<any>>)
    return
  }
}

</mosaic_0001>

<llo_original>
// kernel: tpu_custom_call.1
$region0: #{tpu_custom_call.1}
  #allocation0 [shape = 'u32[]', space=smem, size = 0x4, offset = 0x4, fixed_abs, tag = 'smem constant byte address 0x4 - core index']
  #allocation1 [shape = 'u32[144,128]{1,0:T(1,128)}', space=vmem, size = 0x12000, scoped, tag = 'internal scratch']
  #allocation2 [shape = 's32[1]{0}', space=sflag, size = 0x4, scoped, tag = 'scratch operand']
  #allocation3 [shape = 's32[]', space=sflag, size = 0x4, offset = 0, fixed_abs, tag = 'sflag constant byte address 0x0 - dummy sync flag']
  %s0 = inlined_call_operand.vmem [shape: f32[2,64,16], index: 0, kind: input, shape index: {}]
  %s1 = inlined_call_operand.vmem [shape: f32[2,64,16], index: 1, kind: output, shape index: {}]
  %s2 = sld [smem:[#allocation0]]
  $region36: #{tpu_custom_call.1} parent=0
    _
  %s4 = ssub.s32 1, %s2
  %s5 = scalar_select 0, %s4, %s2
  %p7 = scmp.lt.u32.totalorder 128, 8
  %p8 = pneg %p7
  // Predicated region
  $region2: #{tpu_custom_call.1} parent=0 // pred_check
    _
  $region3: #{tpu_custom_call.1} parent=0 // pred_check_branch
    %10 = sbr.rel (%p7) target = $region5
  $region4: #{tpu_custom_call.1} parent=0 // pred_region
    %s26 = sand.u32 128, 7
    %p27 = scmp.eq.s32.totalorder %s26, 0
    // Predicated region
    $region17: #{tpu_custom_call.1} parent=4 // pred_check
      %p28 = pneg %p27
    $region18: #{tpu_custom_call.1} parent=4 // pred_check_branch
      %30 = sbr.rel (%p28) target = $region20
    $region19: #{tpu_custom_call.1} parent=4 // pred_region
      loop: start=0, step=1, limit=1
      $region21: #{tpu_custom_call.1} parent=19 // loop_pre_header
        _
      $region22: #{tpu_custom_call.1} parent=19 // loop_header
        %s32 = sphi 0, %s36
        %p33 = scmp.ge.s32.totalorder %s32, 1
        %s37 = sphi %s0, %s0
        %s38 = sphi %s1, %s1
      $region23: #{tpu_custom_call.1} parent=19 // loop_header_branch
        %35 = sbr.rel (%p33) target = $region27
      $region24: #{tpu_custom_call.1} parent=19 // loop_body
        %v39 = vld [vmem:[%s37] sm:$0xff]
        %40 = vst [vmem:[%s38] sm:$0xff] %v39
        %v41 = vld [vmem:[%s37 + $0x8] sm:$0xff]
        %42 = vst [vmem:[%s38 + $0x8] sm:$0xff] %v41
        %v43 = vld [vmem:[%s37 + $0x10] sm:$0xff]
        %44 = vst [vmem:[%s38 + $0x10] sm:$0xff] %v43
        %v45 = vld [vmem:[%s37 + $0x18] sm:$0xff]
        %46 = vst [vmem:[%s38 + $0x18] sm:$0xff] %v45
        %v47 = vld [vmem:[%s37 + $0x20] sm:$0xff]
        %48 = vst [vmem:[%s38 + $0x20] sm:$0xff] %v47
        %v49 = vld [vmem:[%s37 + $0x28] sm:$0xff]
        %50 = vst [vmem:[%s38 + $0x28] sm:$0xff] %v49
        %v51 = vld [vmem:[%s37 + $0x30] sm:$0xff]
        %52 = vst [vmem:[%s38 + $0x30] sm:$0xff] %v51
        %v53 = vld [vmem:[%s37 + $0x38] sm:$0xff]
        %54 = vst [vmem:[%s38 + $0x38] sm:$0xff] %v53
        %v55 = vld [vmem:[%s37 + $0x40] sm:$0xff]
        %56 = vst [vmem:[%s38 + $0x40] sm:$0xff] %v55
        %v57 = vld [vmem:[%s37 + $0x48] sm:$0xff]
        %58 = vst [vmem:[%s38 + $0x48] sm:$0xff] %v57
        %v59 = vld [vmem:[%s37 + $0x50] sm:$0xff]
        %60 = vst [vmem:[%s38 + $0x50] sm:$0xff] %v59
        %v61 = vld [vmem:[%s37 + $0x58] sm:$0xff]
        %62 = vst [vmem:[%s38 + $0x58] sm:$0xff] %v61
        %v63 = vld [vmem:[%s37 + $0x60] sm:$0xff]
        %64 = vst [vmem:[%s38 + $0x60] sm:$0xff] %v63
        %v65 = vld [vmem:[%s37 + $0x68] sm:$0xff]
        %66 = vst [vmem:[%s38 + $0x68] sm:$0xff] %v65
        %v67 = vld [vmem:[%s37 + $0x70] sm:$0xff]
        %68 = vst [vmem:[%s38 + $0x70] sm:$0xff] %v67
        %v69 = vld [vmem:[%s37 + $0x78] sm:$0xff]
        %70 = vst [vmem:[%s38 + $0x78] sm:$0xff] %v69
      $region25: #{tpu_custom_call.1} parent=19 // loop_footer
        %s36 = sadd.s32 1, %s32
      $region26: #{tpu_custom_call.1} parent=19 // loop_footer_branch
        %31 = sbr.rel target = $region22
      $region27: #{tpu_custom_call.1} parent=19 // loop_exit
        _
    $region20: #{tpu_custom_call.1} parent=4 // pred_fallthru
      _
    %p71 = pneg %p27
    // Predicated region
    $region28: #{tpu_custom_call.1} parent=4 // pred_check
      _
    $region29: #{tpu_custom_call.1} parent=4 // pred_check_branch
      %73 = sbr.rel (%p27) target = $region31
    $region30: #{tpu_custom_call.1} parent=4 // pred_region
      %s74 = sand.u32 128, 7
    $region31: #{tpu_custom_call.1} parent=4 // pred_fallthru
      _
  $region5: #{tpu_custom_call.1} parent=0 // pred_fallthru
    _
  // Predicated region
  $region6: #{tpu_custom_call.1} parent=0 // pred_check
    %p11 = pneg %p7
  $region7: #{tpu_custom_call.1} parent=0 // pred_check_branch
    %13 = sbr.rel (%p11) target = $region9
  $region8: #{tpu_custom_call.1} parent=0 // pred_region
    %s14 = sshll.u32 1, 128
    %s15 = ssub.s32 %s14, 1
    loop: start=0, step=1, limit=1
    $region10: #{tpu_custom_call.1} parent=8 // loop_pre_header
      _
    $region11: #{tpu_custom_call.1} parent=8 // loop_header
      %s17 = sphi 0, %s21
      %p18 = scmp.ge.s32.totalorder %s17, 1
      %s22 = sphi %s0, %s0
      %s23 = sphi %s1, %s1
    $region12: #{tpu_custom_call.1} parent=8 // loop_header_branch
      %20 = sbr.rel (%p18) target = $region16
    $region13: #{tpu_custom_call.1} parent=8 // loop_body
      %v24 = vld [vmem:[%s22] sm:%s15]
      %25 = vst [vmem:[%s23] sm:%s15] %v24
    $region14: #{tpu_custom_call.1} parent=8 // loop_footer
      %s21 = sadd.s32 1, %s17
    $region15: #{tpu_custom_call.1} parent=8 // loop_footer_branch
      %16 = sbr.rel target = $region11
    $region16: #{tpu_custom_call.1} parent=8 // loop_exit
      _
  $region9: #{tpu_custom_call.1} parent=0 // pred_fallthru
    _
  // Predicated region
  $region32: #{tpu_custom_call.1} parent=0 // pred_check
    _
  $region33: #{tpu_custom_call.1} parent=0 // pred_check_branch
    %77 = sbr.rel (0) target = $region35
  $region34: #{tpu_custom_call.1} parent=0 // pred_region
    %78 = vsyncadd [#allocation2], 2048
  $region35: #{tpu_custom_call.1} parent=0 // pred_fallthru
    _
  %s79 = smul.u32 2, 64
  %s80 = smul.u32 %s79, 1
  %s81 = sshll.u32 %s80, 4
  %82 = dma.done [#allocation2], %s81
  %83 = vsyncmov [#allocation2]
  %s84 = vpop.sfrf %83
  %p85 = scmp.eq.s32.totalorder %s84, 0
  %p86 = pneg %p85
  %88 = shalt.err (%p86)

</llo_original>
